<compile_context>
chip_gen: v5e
topology: v5e:2x2
jax: 0.10.0
libtpu: 0.0.40
codegen_flags: <defaults>
</compile_context>

<pallas_src>
import math
import numpy as np
import jax
import jax.numpy as jnp
from jax.experimental import pallas as pl
from jax.experimental.pallas import tpu as pltpu

# ----------------------------- config (small) -------------------------------
DIM = 32
N_HEAD = 4
N_KV_HEAD = 4                      # module default n_kv_head=None -> n_head
HEAD_DIM = DIM // N_HEAD           # 8
HD2 = HEAD_DIM // 2                # 4
KV_SIZE = N_KV_HEAD * HEAD_DIM     # 32
MULTIPLE_OF = 32
ROPE_BASE = 10000.0
NORM_EPS = 1e-5
BATCH = 2
SEQ = 8


def find_multiple(n, k):
    return n if n % k == 0 else n + k - n % k


HIDDEN = find_multiple(int(2 * (4 * DIM) / 3), MULTIPLE_OF)   # 96
SCALE = 1.0 / math.sqrt(HEAD_DIM)


# ------------------------------ Pallas kernel --------------------------------
def make_kernel(mxu_dtype):
    """Builds the fused TransformerBlock kernel; mxu_dtype is the matmul-operand dtype."""

    def kernel(x_ref, mask_ref, cos_ref, sin_ref, wn1_ref, wn2_ref,
               wproj_ref, wo_ref, w13_ref, w2_ref, o_ref):
        BB, S, D = x_ref.shape          # batch rows handled this grid step
        T = BB * S                      # fused (batch, seq) row count
        H, E = N_HEAD, HEAD_DIM
        HE = H * E
        HID = w2_ref.shape[0]

        def mm(a, b):                   # 2-D matmul, f32 accumulation
            return jnp.dot(a.astype(mxu_dtype), b.astype(mxu_dtype),
                           preferred_element_type=jnp.float32)

        def rmsnorm(v, w):              # v: [T, D], w: [1, D]
            var = jnp.mean(v * v, axis=-1, keepdims=True)
            return v * jax.lax.rsqrt(var + NORM_EPS) * w

        x = x_ref[...].reshape(T, D)    # merge leading dims (sublane-aligned, free)

        # ---------------- attention branch ----------------
        xn = rmsnorm(x, wn1_ref[...])

        # Single fused projection: [T, D] @ [D, 5*H*E] -> [T, 5*H*E]
        proj = mm(xn, wproj_ref[...])
        q1 = proj[:, 0 * HE:1 * HE]     # Q weights in [even|odd] per-head order, pre-scaled
        q2 = proj[:, 1 * HE:2 * HE]     # Q weights in [odd|even] per-head order, pre-scaled
        k1 = proj[:, 2 * HE:3 * HE]
        k2 = proj[:, 3 * HE:4 * HE]
        vv = proj[:, 4 * HE:5 * HE]

        # Rotary as two 32-lane FMAs (cos table = [cos|cos], sin table = [-sin|+sin], head-tiled).
        cos = cos_ref[...]
        sin = sin_ref[...]
        q = q1 * cos + q2 * sin         # attention scale already folded into the Q weights
        k = k1 * cos + k2 * sin

        # Head-batched layout [H, T, E] via cheap static lane slices + leading-axis stack.
        def heads(t):
            return jnp.stack([t[:, h * E:(h + 1) * E] for h in range(H)], axis=0)

        qh, kh, vh = heads(q), heads(k), heads(vv)

        # Scores [H, T, T] (batched matmul contracting last dims).
        s = jax.lax.dot_general(
            qh.astype(mxu_dtype), kh.astype(mxu_dtype),
            dimension_numbers=(((2,), (2,)), ((0,), (0,))),
            preferred_element_type=jnp.float32)
        s = s + mask_ref[...][None]     # additive block-diagonal causal bias (0 / -1e30)

        m = jnp.max(s, axis=-1, keepdims=True)
        p = jnp.exp(s - m)
        p = p * pl.reciprocal(jnp.sum(p, axis=-1, keepdims=True), approx=True)

        # Context [H, T, E].
        ctx = jax.lax.dot_general(
            p.astype(mxu_dtype), vh.astype(mxu_dtype),
            dimension_numbers=(((2,), (1,)), ((0,), (0,))),
            preferred_element_type=jnp.float32)

        # Re-flatten heads to [T, H*E] and do ONE output projection against wo (natural layout).
        ctx_flat = jnp.concatenate([ctx[h] for h in range(H)], axis=-1)
        attn_out = mm(ctx_flat, wo_ref[...])                       # [T, D]
        h_res = x + attn_out

        # ---------------- feed-forward (SwiGLU) branch ----------------
        hn = rmsnorm(h_res, wn2_ref[...])
        gu = mm(hn, w13_ref[...])                                  # fused w1|w3 up-projection
        g = gu[:, :HID]
        u = gu[:, HID:]
        ffn = mm(g * jax.nn.sigmoid(g) * u, w2_ref[...])           # [T, D]

        o_ref[...] = (h_res + ffn).reshape(BB, S, D).astype(o_ref.dtype)

    return kernel


# ------------------------------ wrapper --------------------------------------
def transformer_block(x, freqs_cis, wqkv_t, wo_t, w1_t, w3_t, w2_t, wn1, wn2,
                      batch_block=None, mxu_dtype=jnp.float32):
    """x: [B, S, D] f32, freqs_cis: [S, HD2, 2] f32, weights pre-transposed (y = x @ W).

    batch_block defaults to B (one grid step on every generation: splitting this tiny
    workload across TensorCores only adds launch overhead).  mxu_dtype=jnp.bfloat16
    is the v6e/v7x choice at realistic sizes; f32 here for a tight correctness check.
    """
    B, S, D = x.shape
    if batch_block is None:
        batch_block = B
    assert B % batch_block == 0
    T = batch_block * S
    H, E = N_HEAD, HEAD_DIM

    # --- host-side weight prep: rotary layout + attention scale folded into weights ---
    perm_a = np.concatenate([np.arange(0, E, 2), np.arange(1, E, 2)])   # [even|odd]
    perm_b = np.concatenate([np.arange(1, E, 2), np.arange(0, E, 2)])   # [odd|even]
    idx_a = (np.arange(H)[:, None] * E + perm_a[None, :]).reshape(-1)
    idx_b = (np.arange(H)[:, None] * E + perm_b[None, :]).reshape(-1)

    wq = wqkv_t[:, :DIM]
    wk = wqkv_t[:, DIM:DIM + KV_SIZE]
    wv = wqkv_t[:, DIM + KV_SIZE:]
    wproj = jnp.concatenate(
        [wq[:, idx_a] * SCALE, wq[:, idx_b] * SCALE,    # Q (scale folded in)
         wk[:, idx_a], wk[:, idx_b],                    # K
         wv], axis=1)                                   # V     -> [D, 5*H*E]

    w13 = jnp.concatenate([w1_t, w3_t], axis=1)         # fused FFN up-projection [D, 2*HID]

    # Rotary tables, head-tiled to [T, H*E] so the FMAs run at full 32-lane width.
    cos = freqs_cis[..., 0]                              # [S, HD2]
    sin = freqs_cis[..., 1]
    cos_head = jnp.concatenate([cos, cos], axis=-1)      # [S, E]  ([cos|cos])
    sin_head = jnp.concatenate([-sin, sin], axis=-1)     # [S, E]  ([-sin|+sin])
    cos_t = jnp.tile(jnp.tile(cos_head, (1, H)), (batch_block, 1))   # [T, H*E]
    sin_t = jnp.tile(jnp.tile(sin_head, (1, H)), (batch_block, 1))   # [T, H*E]

    # Additive causal mask, block-diagonal across folded batch rows (grid-invariant).
    row = np.arange(T)[:, None]
    col = np.arange(T)[None, :]
    allowed = (row // S == col // S) & (col <= row)
    mask_bias = jnp.asarray(np.where(allowed, 0.0, -1e30), dtype=jnp.float32)

    wn1_2d = wn1.reshape(1, D)
    wn2_2d = wn2.reshape(1, D)

    def full(a):                                         # grid-invariant full-array spec
        zero = (0,) * a.ndim
        return pl.BlockSpec(a.shape, lambda b, _z=zero: _z)

    kernel = make_kernel(mxu_dtype)
    return pl.pallas_call(
        kernel,
        out_shape=jax.ShapeDtypeStruct((B, S, D), x.dtype),
        grid=(B // batch_block,),
        in_specs=[
            pl.BlockSpec((batch_block, S, D), lambda b: (b, 0, 0)),   # x
            full(mask_bias),                                          # additive causal mask
            full(cos_t), full(sin_t),                                 # rotary tables
            full(wn1_2d), full(wn2_2d),                               # norm weights
            full(wproj), full(wo_t), full(w13), full(w2_t),           # fused weights
        ],
        out_specs=pl.BlockSpec((batch_block, S, D), lambda b: (b, 0, 0)),
        compiler_params=pltpu.CompilerParams(dimension_semantics=("parallel",)),
    )(x, mask_bias, cos_t, sin_t, wn1_2d, wn2_2d, wproj, wo_t, w13, w2_t)


# ------------------------- pure-JAX reference (PyTorch semantics) ------------
def ref_forward(x, freqs_cis, wqkv_t, wo_t, w1_t, w3_t, w2_t, wn1, wn2):
    B, S, D = x.shape

    def rmsnorm(v, w):
        return v * jax.lax.rsqrt(jnp.mean(v * v, axis=-1, keepdims=True) + NORM_EPS) * w

    def rope(t):  # t: [B, S, nh, HEAD_DIM], interleaved pairs
        ts = t.reshape(B, S, -1, HD2, 2)
        fc = freqs_cis.reshape(1, S, 1, HD2, 2)
        out = jnp.stack([ts[..., 0] * fc[..., 0] - ts[..., 1] * fc[..., 1],
                         ts[..., 1] * fc[..., 0] + ts[..., 0] * fc[..., 1]], axis=-1)
        return out.reshape(t.shape)

    xn = rmsnorm(x, wn1)
    qkv = xn @ wqkv_t
    q = qkv[..., :DIM].reshape(B, S, N_HEAD, HEAD_DIM)
    k = qkv[..., DIM:DIM + KV_SIZE].reshape(B, S, N_KV_HEAD, HEAD_DIM)
    v = qkv[..., DIM + KV_SIZE:].reshape(B, S, N_KV_HEAD, HEAD_DIM)
    q, k = rope(q), rope(k)
    q, k, v = (t.transpose(0, 2, 1, 3) for t in (q, k, v))
    scores = jnp.einsum('bhqd,bhkd->bhqk', q, k) * SCALE
    scores = jnp.where(jnp.tril(jnp.ones((S, S), bool)), scores, -jnp.inf)
    attn = jax.nn.softmax(scores, axis=-1)
    out = jnp.einsum('bhqk,bhkd->bhqd', attn, v)
    out = out.transpose(0, 2, 1, 3).reshape(B, S, DIM) @ wo_t
    h = x + out
    hn = rmsnorm(h, wn2)
    ffn = (jax.nn.silu(hn @ w1_t) * (hn @ w3_t)) @ w2_t
    return h + ffn


# --------------------------------- main ---------------------------------------
if __name__ == "__main__":
    key = jax.random.PRNGKey(0)
    kx, k1, k2, k3, k4, k5 = jax.random.split(key, 6)

    x = jax.random.normal(kx, (BATCH, SEQ, DIM), dtype=jnp.float32)

    wqkv_t = 0.05 * jax.random.normal(k1, (DIM, DIM + 2 * KV_SIZE), dtype=jnp.float32)
    wo_t = 0.05 * jax.random.normal(k2, (DIM, DIM), dtype=jnp.float32)
    w1_t = 0.05 * jax.random.normal(k3, (DIM, HIDDEN), dtype=jnp.float32)
    w3_t = 0.05 * jax.random.normal(k4, (DIM, HIDDEN), dtype=jnp.float32)
    w2_t = 0.05 * jax.random.normal(k5, (HIDDEN, DIM), dtype=jnp.float32)
    wn1 = jnp.ones((DIM,), dtype=jnp.float32)   # RMSNorm weights init to ones
    wn2 = jnp.ones((DIM,), dtype=jnp.float32)

    # rotary table: freqs_cis[t, p] = (cos, sin) of t / base^(2p/head_dim)
    inv_freq = 1.0 / (ROPE_BASE ** (np.arange(0, HEAD_DIM, 2) / HEAD_DIM))
    angles = np.arange(SEQ)[:, None] * inv_freq[None, :]
    freqs_cis = jnp.asarray(
        np.stack([np.cos(angles), np.sin(angles)], axis=-1), dtype=jnp.float32)

    out = transformer_block(x, freqs_cis, wqkv_t, wo_t, w1_t, w3_t, w2_t, wn1, wn2)
    out = jax.block_until_ready(out)

    ref = ref_forward(x, freqs_cis, wqkv_t, wo_t, w1_t, w3_t, w2_t, wn1, wn2)
    # Tolerance covers pl.reciprocal(approx=True) in the softmax denominator
    # (~2^-12 relative error); matmuls stay f32 here so everything else is tight.
    np.testing.assert_allclose(np.asarray(out), np.asarray(ref), atol=2e-3, rtol=2e-3)

    print("KERNEL_OK")
</pallas_src>

<mosaic_0001>
module attributes {stable_mosaic.version = 11 : i64} {
  func.func @kernel(%arg0: i32, %arg1: memref<2x8x32xf32, #tpu.memory_space<vmem>>, %arg2: memref<16x16xf32, #tpu.memory_space<vmem>>, %arg3: memref<16x32xf32, #tpu.memory_space<vmem>>, %arg4: memref<16x32xf32, #tpu.memory_space<vmem>>, %arg5: memref<1x32xf32, #tpu.memory_space<vmem>>, %arg6: memref<1x32xf32, #tpu.memory_space<vmem>>, %arg7: memref<32x160xf32, #tpu.memory_space<vmem>>, %arg8: memref<32x32xf32, #tpu.memory_space<vmem>>, %arg9: memref<32x192xf32, #tpu.memory_space<vmem>>, %arg10: memref<96x32xf32, #tpu.memory_space<vmem>>, %arg11: memref<2x8x32xf32, #tpu.memory_space<vmem>>) attributes {dimension_semantics = [#tpu.dimension_semantics<parallel>], iteration_bounds = array<i64: 1>, scalar_prefetch = 0 : i64, scratch_operands = 0 : i64, tpu.core_type = #tpu.core_type<tc>, window_params = [{transform_indices = @transform_0, window_bounds = array<i64: 2, 8, 32>}, {pipeline_mode = #tpu.pipeline_mode<synchronous>, transform_indices = @transform_1, window_bounds = array<i64: 16, 16>}, {pipeline_mode = #tpu.pipeline_mode<synchronous>, transform_indices = @transform_2, window_bounds = array<i64: 16, 32>}, {pipeline_mode = #tpu.pipeline_mode<synchronous>, transform_indices = @transform_3, window_bounds = array<i64: 16, 32>}, {pipeline_mode = #tpu.pipeline_mode<synchronous>, transform_indices = @transform_4, window_bounds = array<i64: 1, 32>}, {pipeline_mode = #tpu.pipeline_mode<synchronous>, transform_indices = @transform_5, window_bounds = array<i64: 1, 32>}, {pipeline_mode = #tpu.pipeline_mode<synchronous>, transform_indices = @transform_6, window_bounds = array<i64: 32, 160>}, {pipeline_mode = #tpu.pipeline_mode<synchronous>, transform_indices = @transform_7, window_bounds = array<i64: 32, 32>}, {pipeline_mode = #tpu.pipeline_mode<synchronous>, transform_indices = @transform_8, window_bounds = array<i64: 32, 192>}, {pipeline_mode = #tpu.pipeline_mode<synchronous>, transform_indices = @transform_9, window_bounds = array<i64: 96, 32>}, {transform_indices = @transform_10, window_bounds = array<i64: 2, 8, 32>}]} {
    %c0 = arith.constant 0 : index
    %c0_0 = arith.constant 0 : index
    %c0_1 = arith.constant 0 : index
    %0 = vector.load %arg1[%c0, %c0_0, %c0_1] : memref<2x8x32xf32, #tpu.memory_space<vmem>>, vector<2x8x32xf32>
    %1 = vector.shape_cast %0 : vector<2x8x32xf32> to vector<16x32xf32>
    %c0_2 = arith.constant 0 : index
    %c0_3 = arith.constant 0 : index
    %2 = vector.load %arg5[%c0_2, %c0_3] : memref<1x32xf32, #tpu.memory_space<vmem>>, vector<1x32xf32>
    %3 = arith.mulf %1, %1 : vector<16x32xf32>
    %cst = arith.constant dense<0.000000e+00> : vector<16xf32>
    %4 = vector.multi_reduction <add>, %3, %cst [1] : vector<16x32xf32> to vector<16xf32>
    %5 = vector.shape_cast %4 : vector<16xf32> to vector<16x1xf32>
    %cst_4 = arith.constant 3.200000e+01 : f32
    %6 = vector.broadcast %cst_4 : f32 to vector<16x1xf32>
    %7 = arith.divf %5, %6 : vector<16x1xf32>
    %cst_5 = arith.constant 9.99999974E-6 : f32
    %8 = vector.broadcast %cst_5 : f32 to vector<16x1xf32>
    %9 = arith.addf %7, %8 : vector<16x1xf32>
    %10 = math.rsqrt %9 : vector<16x1xf32>
    %11 = vector.broadcast %10 : vector<16x1xf32> to vector<16x32xf32>
    %12 = arith.mulf %1, %11 : vector<16x32xf32>
    %13 = vector.broadcast %2 : vector<1x32xf32> to vector<16x32xf32>
    %14 = arith.mulf %12, %13 : vector<16x32xf32>
    %c0_6 = arith.constant 0 : index
    %c0_7 = arith.constant 0 : index
    %15 = vector.load %arg7[%c0_6, %c0_7] : memref<32x160xf32, #tpu.memory_space<vmem>>, vector<32x160xf32>
    %cst_8 = arith.constant dense<0.000000e+00> : vector<16x160xf32>
    %16 = tpu.matmul %14, %15, %cst_8 {dimension_numbers = #tpu.dot_dimension_numbers<[1], [0], [0], [1], [0, 0, 1, 1], [], []>} : vector<16x32xf32>, vector<32x160xf32>, vector<16x160xf32> -> vector<16x160xf32>
    %17 = vector.extract_strided_slice %16 {offsets = [0, 0], sizes = [16, 32], strides = [1, 1]} : vector<16x160xf32> to vector<16x32xf32>
    %18 = vector.extract_strided_slice %16 {offsets = [0, 32], sizes = [16, 32], strides = [1, 1]} : vector<16x160xf32> to vector<16x32xf32>
    %19 = vector.extract_strided_slice %16 {offsets = [0, 64], sizes = [16, 32], strides = [1, 1]} : vector<16x160xf32> to vector<16x32xf32>
    %20 = vector.extract_strided_slice %16 {offsets = [0, 96], sizes = [16, 32], strides = [1, 1]} : vector<16x160xf32> to vector<16x32xf32>
    %21 = vector.extract_strided_slice %16 {offsets = [0, 128], sizes = [16, 32], strides = [1, 1]} : vector<16x160xf32> to vector<16x32xf32>
    %c0_9 = arith.constant 0 : index
    %c0_10 = arith.constant 0 : index
    %22 = vector.load %arg3[%c0_9, %c0_10] : memref<16x32xf32, #tpu.memory_space<vmem>>, vector<16x32xf32>
    %c0_11 = arith.constant 0 : index
    %c0_12 = arith.constant 0 : index
    %23 = vector.load %arg4[%c0_11, %c0_12] : memref<16x32xf32, #tpu.memory_space<vmem>>, vector<16x32xf32>
    %24 = arith.mulf %17, %22 : vector<16x32xf32>
    %25 = arith.mulf %18, %23 : vector<16x32xf32>
    %26 = arith.addf %24, %25 : vector<16x32xf32>
    %27 = arith.mulf %19, %22 : vector<16x32xf32>
    %28 = arith.mulf %20, %23 : vector<16x32xf32>
    %29 = arith.addf %27, %28 : vector<16x32xf32>
    %30 = vector.extract_strided_slice %26 {offsets = [0, 0], sizes = [16, 8], strides = [1, 1]} : vector<16x32xf32> to vector<16x8xf32>
    %31 = vector.extract_strided_slice %26 {offsets = [0, 8], sizes = [16, 8], strides = [1, 1]} : vector<16x32xf32> to vector<16x8xf32>
    %32 = vector.extract_strided_slice %26 {offsets = [0, 16], sizes = [16, 8], strides = [1, 1]} : vector<16x32xf32> to vector<16x8xf32>
    %33 = vector.extract_strided_slice %26 {offsets = [0, 24], sizes = [16, 8], strides = [1, 1]} : vector<16x32xf32> to vector<16x8xf32>
    %34 = vector.shape_cast %30 : vector<16x8xf32> to vector<1x16x8xf32>
    %35 = vector.shape_cast %31 : vector<16x8xf32> to vector<1x16x8xf32>
    %36 = vector.shape_cast %32 : vector<16x8xf32> to vector<1x16x8xf32>
    %37 = vector.shape_cast %33 : vector<16x8xf32> to vector<1x16x8xf32>
    %38 = tpu.concatenate %34, %35, %36, %37 in 0 : vector<1x16x8xf32>, vector<1x16x8xf32>, vector<1x16x8xf32>, vector<1x16x8xf32> -> vector<4x16x8xf32>
    %39 = vector.extract_strided_slice %29 {offsets = [0, 0], sizes = [16, 8], strides = [1, 1]} : vector<16x32xf32> to vector<16x8xf32>
    %40 = vector.extract_strided_slice %29 {offsets = [0, 8], sizes = [16, 8], strides = [1, 1]} : vector<16x32xf32> to vector<16x8xf32>
    %41 = vector.extract_strided_slice %29 {offsets = [0, 16], sizes = [16, 8], strides = [1, 1]} : vector<16x32xf32> to vector<16x8xf32>
    %42 = vector.extract_strided_slice %29 {offsets = [0, 24], sizes = [16, 8], strides = [1, 1]} : vector<16x32xf32> to vector<16x8xf32>
    %43 = vector.shape_cast %39 : vector<16x8xf32> to vector<1x16x8xf32>
    %44 = vector.shape_cast %40 : vector<16x8xf32> to vector<1x16x8xf32>
    %45 = vector.shape_cast %41 : vector<16x8xf32> to vector<1x16x8xf32>
    %46 = vector.shape_cast %42 : vector<16x8xf32> to vector<1x16x8xf32>
    %47 = tpu.concatenate %43, %44, %45, %46 in 0 : vector<1x16x8xf32>, vector<1x16x8xf32>, vector<1x16x8xf32>, vector<1x16x8xf32> -> vector<4x16x8xf32>
    %48 = vector.extract_strided_slice %21 {offsets = [0, 0], sizes = [16, 8], strides = [1, 1]} : vector<16x32xf32> to vector<16x8xf32>
    %49 = vector.extract_strided_slice %21 {offsets = [0, 8], sizes = [16, 8], strides = [1, 1]} : vector<16x32xf32> to vector<16x8xf32>
    %50 = vector.extract_strided_slice %21 {offsets = [0, 16], sizes = [16, 8], strides = [1, 1]} : vector<16x32xf32> to vector<16x8xf32>
    %51 = vector.extract_strided_slice %21 {offsets = [0, 24], sizes = [16, 8], strides = [1, 1]} : vector<16x32xf32> to vector<16x8xf32>
    %52 = vector.shape_cast %48 : vector<16x8xf32> to vector<1x16x8xf32>
    %53 = vector.shape_cast %49 : vector<16x8xf32> to vector<1x16x8xf32>
    %54 = vector.shape_cast %50 : vector<16x8xf32> to vector<1x16x8xf32>
    %55 = vector.shape_cast %51 : vector<16x8xf32> to vector<1x16x8xf32>
    %56 = tpu.concatenate %52, %53, %54, %55 in 0 : vector<1x16x8xf32>, vector<1x16x8xf32>, vector<1x16x8xf32>, vector<1x16x8xf32> -> vector<4x16x8xf32>
    %cst_13 = arith.constant dense<0.000000e+00> : vector<4x16x16xf32>
    %57 = tpu.matmul %38, %47, %cst_13 {dimension_numbers = #tpu.dot_dimension_numbers<[2], [2], [1], [1], [0, 0, 0, 1, 1, 1], [0], [0]>} : vector<4x16x8xf32>, vector<4x16x8xf32>, vector<4x16x16xf32> -> vector<4x16x16xf32>
    %c0_14 = arith.constant 0 : index
    %c0_15 = arith.constant 0 : index
    %58 = vector.load %arg2[%c0_14, %c0_15] : memref<16x16xf32, #tpu.memory_space<vmem>>, vector<16x16xf32>
    %59 = vector.shape_cast %58 : vector<16x16xf32> to vector<1x16x16xf32>
    %60 = vector.broadcast %59 : vector<1x16x16xf32> to vector<4x16x16xf32>
    %61 = arith.addf %57, %60 : vector<4x16x16xf32>
    %cst_16 = arith.constant dense<0xFF800000> : vector<4x16xf32>
    %62 = vector.multi_reduction <maximumf>, %61, %cst_16 [2] : vector<4x16x16xf32> to vector<4x16xf32>
    %63 = vector.shape_cast %62 : vector<4x16xf32> to vector<4x16x1xf32>
    %64 = vector.broadcast %63 : vector<4x16x1xf32> to vector<4x16x16xf32>
    %65 = arith.subf %61, %64 : vector<4x16x16xf32>
    %66 = math.exp %65 : vector<4x16x16xf32>
    %cst_17 = arith.constant dense<0.000000e+00> : vector<4x16xf32>
    %67 = vector.multi_reduction <add>, %66, %cst_17 [2] : vector<4x16x16xf32> to vector<4x16xf32>
    %68 = vector.shape_cast %67 : vector<4x16xf32> to vector<4x16x1xf32>
    %69 = tpu.reciprocal %68 {approx = true} : vector<4x16x1xf32> -> vector<4x16x1xf32>
    %70 = vector.broadcast %69 : vector<4x16x1xf32> to vector<4x16x16xf32>
    %71 = arith.mulf %66, %70 : vector<4x16x16xf32>
    %cst_18 = arith.constant dense<0.000000e+00> : vector<4x16x8xf32>
    %72 = tpu.matmul %71, %56, %cst_18 {dimension_numbers = #tpu.dot_dimension_numbers<[2], [1], [1], [2], [0, 0, 0, 1, 1, 2], [0], [0]>} : vector<4x16x16xf32>, vector<4x16x8xf32>, vector<4x16x8xf32> -> vector<4x16x8xf32>
    %73 = vector.extract_strided_slice %72 {offsets = [0, 0, 0], sizes = [1, 16, 8], strides = [1, 1, 1]} : vector<4x16x8xf32> to vector<1x16x8xf32>
    %74 = vector.shape_cast %73 : vector<1x16x8xf32> to vector<16x8xf32>
    %75 = vector.extract_strided_slice %72 {offsets = [1, 0, 0], sizes = [1, 16, 8], strides = [1, 1, 1]} : vector<4x16x8xf32> to vector<1x16x8xf32>
    %76 = vector.shape_cast %75 : vector<1x16x8xf32> to vector<16x8xf32>
    %77 = vector.extract_strided_slice %72 {offsets = [2, 0, 0], sizes = [1, 16, 8], strides = [1, 1, 1]} : vector<4x16x8xf32> to vector<1x16x8xf32>
    %78 = vector.shape_cast %77 : vector<1x16x8xf32> to vector<16x8xf32>
    %79 = vector.extract_strided_slice %72 {offsets = [3, 0, 0], sizes = [1, 16, 8], strides = [1, 1, 1]} : vector<4x16x8xf32> to vector<1x16x8xf32>
    %80 = vector.shape_cast %79 : vector<1x16x8xf32> to vector<16x8xf32>
    %81 = tpu.concatenate %74, %76, %78, %80 in 1 : vector<16x8xf32>, vector<16x8xf32>, vector<16x8xf32>, vector<16x8xf32> -> vector<16x32xf32>
    %c0_19 = arith.constant 0 : index
    %c0_20 = arith.constant 0 : index
    %82 = vector.load %arg8[%c0_19, %c0_20] : memref<32x32xf32, #tpu.memory_space<vmem>>, vector<32x32xf32>
    %cst_21 = arith.constant dense<0.000000e+00> : vector<16x32xf32>
    %83 = tpu.matmul %81, %82, %cst_21 {dimension_numbers = #tpu.dot_dimension_numbers<[1], [0], [0], [1], [0, 0, 1, 1], [], []>} : vector<16x32xf32>, vector<32x32xf32>, vector<16x32xf32> -> vector<16x32xf32>
    %84 = arith.addf %1, %83 : vector<16x32xf32>
    %c0_22 = arith.constant 0 : index
    %c0_23 = arith.constant 0 : index
    %85 = vector.load %arg6[%c0_22, %c0_23] : memref<1x32xf32, #tpu.memory_space<vmem>>, vector<1x32xf32>
    %86 = arith.mulf %84, %84 : vector<16x32xf32>
    %cst_24 = arith.constant dense<0.000000e+00> : vector<16xf32>
    %87 = vector.multi_reduction <add>, %86, %cst_24 [1] : vector<16x32xf32> to vector<16xf32>
    %88 = vector.shape_cast %87 : vector<16xf32> to vector<16x1xf32>
    %cst_25 = arith.constant 3.200000e+01 : f32
    %89 = vector.broadcast %cst_25 : f32 to vector<16x1xf32>
    %90 = arith.divf %88, %89 : vector<16x1xf32>
    %cst_26 = arith.constant 9.99999974E-6 : f32
    %91 = vector.broadcast %cst_26 : f32 to vector<16x1xf32>
    %92 = arith.addf %90, %91 : vector<16x1xf32>
    %93 = math.rsqrt %92 : vector<16x1xf32>
    %94 = vector.broadcast %93 : vector<16x1xf32> to vector<16x32xf32>
    %95 = arith.mulf %84, %94 : vector<16x32xf32>
    %96 = vector.broadcast %85 : vector<1x32xf32> to vector<16x32xf32>
    %97 = arith.mulf %95, %96 : vector<16x32xf32>
    %c0_27 = arith.constant 0 : index
    %c0_28 = arith.constant 0 : index
    %98 = vector.load %arg9[%c0_27, %c0_28] : memref<32x192xf32, #tpu.memory_space<vmem>>, vector<32x192xf32>
    %cst_29 = arith.constant dense<0.000000e+00> : vector<16x192xf32>
    %99 = tpu.matmul %97, %98, %cst_29 {dimension_numbers = #tpu.dot_dimension_numbers<[1], [0], [0], [1], [0, 0, 1, 1], [], []>} : vector<16x32xf32>, vector<32x192xf32>, vector<16x192xf32> -> vector<16x192xf32>
    %100 = vector.extract_strided_slice %99 {offsets = [0, 0], sizes = [16, 96], strides = [1, 1]} : vector<16x192xf32> to vector<16x96xf32>
    %101 = vector.extract_strided_slice %99 {offsets = [0, 96], sizes = [16, 96], strides = [1, 1]} : vector<16x192xf32> to vector<16x96xf32>
    %102 = arith.negf %100 : vector<16x96xf32>
    %103 = math.exp %102 : vector<16x96xf32>
    %cst_30 = arith.constant 1.000000e+00 : f32
    %104 = vector.broadcast %cst_30 : f32 to vector<16x96xf32>
    %105 = arith.addf %104, %103 : vector<16x96xf32>
    %106 = arith.divf %104, %105 : vector<16x96xf32>
    %107 = arith.mulf %100, %106 : vector<16x96xf32>
    %108 = arith.mulf %107, %101 : vector<16x96xf32>
    %c0_31 = arith.constant 0 : index
    %c0_32 = arith.constant 0 : index
    %109 = vector.load %arg10[%c0_31, %c0_32] : memref<96x32xf32, #tpu.memory_space<vmem>>, vector<96x32xf32>
    %cst_33 = arith.constant dense<0.000000e+00> : vector<16x32xf32>
    %110 = tpu.matmul %108, %109, %cst_33 {dimension_numbers = #tpu.dot_dimension_numbers<[1], [0], [0], [1], [0, 0, 1, 1], [], []>} : vector<16x96xf32>, vector<96x32xf32>, vector<16x32xf32> -> vector<16x32xf32>
    %111 = arith.addf %84, %110 : vector<16x32xf32>
    %112 = vector.shape_cast %111 : vector<16x32xf32> to vector<2x8x32xf32>
    %c0_34 = arith.constant 0 : index
    %c0_35 = arith.constant 0 : index
    %c0_36 = arith.constant 0 : index
    %113 = vector.load %arg11[%c0_34, %c0_35, %c0_36] : memref<2x8x32xf32, #tpu.memory_space<vmem>>, vector<2x8x32xf32>
    tpu.vector_store %arg11[%c0_34, %c0_35, %c0_36], %112 {strides = array<i32>} : memref<2x8x32xf32, #tpu.memory_space<vmem>>, vector<2x8x32xf32>,
    return
  }
  func.func @transform_0(%arg0: i32) -> (i32, i32, i32) {
    %c0_i32 = arith.constant 0 : i32
    %c0_i32_0 = arith.constant 0 : i32
    %c0_i32_1 = arith.constant 0 : i32
    return %arg0, %c0_i32, %c0_i32_0 : i32, i32, i32
  }
  func.func @transform_1(%arg0: i32) -> (i32, i32) {
    %c0_i32 = arith.constant 0 : i32
    %c0_i32_0 = arith.constant 0 : i32
    %c0_i32_1 = arith.constant 0 : i32
    return %c0_i32, %c0_i32_0 : i32, i32
  }
  func.func @transform_2(%arg0: i32) -> (i32, i32) {
    %c0_i32 = arith.constant 0 : i32
    %c0_i32_0 = arith.constant 0 : i32
    %c0_i32_1 = arith.constant 0 : i32
    return %c0_i32, %c0_i32_0 : i32, i32
  }
  func.func @transform_3(%arg0: i32) -> (i32, i32) {
    %c0_i32 = arith.constant 0 : i32
    %c0_i32_0 = arith.constant 0 : i32
    %c0_i32_1 = arith.constant 0 : i32
    return %c0_i32, %c0_i32_0 : i32, i32
  }
  func.func @transform_4(%arg0: i32) -> (i32, i32) {
    %c0_i32 = arith.constant 0 : i32
    %c0_i32_0 = arith.constant 0 : i32
    %c0_i32_1 = arith.constant 0 : i32
    return %c0_i32, %c0_i32_0 : i32, i32
  }
  func.func @transform_5(%arg0: i32) -> (i32, i32) {
    %c0_i32 = arith.constant 0 : i32
    %c0_i32_0 = arith.constant 0 : i32
    %c0_i32_1 = arith.constant 0 : i32
    return %c0_i32, %c0_i32_0 : i32, i32
  }
  func.func @transform_6(%arg0: i32) -> (i32, i32) {
    %c0_i32 = arith.constant 0 : i32
    %c0_i32_0 = arith.constant 0 : i32
    %c0_i32_1 = arith.constant 0 : i32
    return %c0_i32, %c0_i32_0 : i32, i32
  }
  func.func @transform_7(%arg0: i32) -> (i32, i32) {
    %c0_i32 = arith.constant 0 : i32
    %c0_i32_0 = arith.constant 0 : i32
    %c0_i32_1 = arith.constant 0 : i32
    return %c0_i32, %c0_i32_0 : i32, i32
  }
  func.func @transform_8(%arg0: i32) -> (i32, i32) {
    %c0_i32 = arith.constant 0 : i32
    %c0_i32_0 = arith.constant 0 : i32
    %c0_i32_1 = arith.constant 0 : i32
    return %c0_i32, %c0_i32_0 : i32, i32
  }
  func.func @transform_9(%arg0: i32) -> (i32, i32) {
    %c0_i32 = arith.constant 0 : i32
    %c0_i32_0 = arith.constant 0 : i32
    %c0_i32_1 = arith.constant 0 : i32
    return %c0_i32, %c0_i32_0 : i32, i32
  }
  func.func @transform_10(%arg0: i32) -> (i32, i32, i32) {
    %c0_i32 = arith.constant 0 : i32
    %c0_i32_0 = arith.constant 0 : i32
    %c0_i32_1 = arith.constant 0 : i32
    return %arg0, %c0_i32, %c0_i32_0 : i32, i32, i32
  }
}

</mosaic_0001>

<llo_original>
// kernel: tpu_custom_call.1
$region0: #{tpu_custom_call.1}
  #allocation0 [shape = 'u32[]', space=smem, size = 0x4, offset = 0x4, fixed_abs, tag = 'smem constant byte address 0x4 - core index']
  #allocation1 [shape = 'u32[72,128]{1,0:T(1,128)}', space=vmem, size = 0x9000, scoped, tag = 'internal scratch']
  %s0 = inlined_call_operand.hbm [shape: f32[2,8,32], index: 0, kind: input, shape index: {}]
  %s1 = inlined_call_operand.hbm [shape: f32[16,16], index: 1, kind: input, shape index: {}]
  %s2 = inlined_call_operand.hbm [shape: f32[16,32], index: 2, kind: input, shape index: {}]
  %s3 = inlined_call_operand.hbm [shape: f32[16,32], index: 3, kind: input, shape index: {}]
  %s4 = inlined_call_operand.vmem [shape: f32[1,32], index: 4, kind: input, shape index: {}]
  %s5 = inlined_call_operand.vmem [shape: f32[1,32], index: 5, kind: input, shape index: {}]
  %s6 = inlined_call_operand.vmem [shape: f32[32,160], index: 6, kind: input, shape index: {}]
  %s7 = inlined_call_operand.hbm [shape: f32[32,32], index: 7, kind: input, shape index: {}]
  %s8 = inlined_call_operand.vmem [shape: f32[32,192], index: 8, kind: input, shape index: {}]
  %s9 = inlined_call_operand.vmem [shape: f32[96,32], index: 9, kind: input, shape index: {}]
  %s10 = inlined_call_operand.hbm [shape: f32[2,8,32], index: 10, kind: output, shape index: {}]
  %s11 = sld [smem:[#allocation0]]
  $region70: #{tpu_custom_call.1} parent=0
    _
  %s13 = ssub.s32 1, %s11
  %s14 = scalar_select 0, %s13, %s11
  $region1: #{tpu_custom_call.1} parent=0
    #allocation2 [shape = 'u8[8192]{0}', space=vmem, size = 0x2000, scoped, tag = 'input window, operand 0, single buffered']
    #allocation3 [shape = 's32[1]{0}', space=sflag, size = 0x4, scoped, tag = 'scoped memory for tpu_custom_call.1']
    #allocation4 [shape = 's32[1]{0}', space=sflag, size = 0x4, scoped, tag = 'scoped memory for tpu_custom_call.1']
    #allocation5 [shape = 'u8[8192]{0}', space=vmem, size = 0x2000, scoped, tag = 'input window, operand 1, single buffered']
    #allocation6 [shape = 's32[1]{0}', space=sflag, size = 0x4, scoped, tag = 'scoped memory for tpu_custom_call.1']
    #allocation7 [shape = 'u8[8192]{0}', space=vmem, size = 0x2000, scoped, tag = 'input window, operand 2, single buffered']
    #allocation8 [shape = 'u8[8192]{0}', space=vmem, size = 0x2000, scoped, tag = 'input window, operand 3, single buffered']
    #allocation9 [shape = 's32[1]{0}', space=sflag, size = 0x4, scoped, tag = 'scoped memory for tpu_custom_call.1']
    #allocation10 [shape = 'u8[16384]{0}', space=vmem, size = 0x4000, scoped, tag = 'input window, operand 7, single buffered']
    #allocation11 [shape = 'u8[8192]{0}', space=vmem, size = 0x2000, scoped, tag = 'output window, operand 0, single buffered']
    %15 = vsyncpa [#allocation3], 0
    %16 = vsyncpa [#allocation6], 0
    %17 = vsyncpa [#allocation9], 0
    %18 = vsyncpa [#allocation4], 0
    // Predicated region
    $region2: #{tpu_custom_call.1} parent=1 // pred_check
      _
    $region3: #{tpu_custom_call.1} parent=1 // pred_check_branch
      %20 = sbr.rel (0) target = $region5
    $region4: #{tpu_custom_call.1} parent=1 // pred_region
      %22 = vsyncadd [#allocation3], 0
      %s23 = sshll.u32 %s0, 4
      %s24 = int_to_ptr.hbm [resolvable:$true] %s23
      %s25 = sshll.u32 [#allocation2], 4
      %s26 = int_to_ptr.vmem [resolvable:$true] %s25
      %31 = dma.hbm_to_vmem [thread:$0]  %s24, 256, %s26, [#allocation3], 128, 128, 8
    $region5: #{tpu_custom_call.1} parent=1 // pred_fallthru
      _
    // Predicated region
    $region6: #{tpu_custom_call.1} parent=1 // pred_check
      _
    $region7: #{tpu_custom_call.1} parent=1 // pred_check_branch
      %33 = sbr.rel (0) target = $region9
    $region8: #{tpu_custom_call.1} parent=1 // pred_region
      %35 = vsyncadd [#allocation6], 0
      %s36 = sshll.u32 %s1, 4
      %s37 = int_to_ptr.hbm [resolvable:$true] %s36
      %s38 = sshll.u32 [#allocation5], 4
      %s39 = int_to_ptr.vmem [resolvable:$true] %s38
      %44 = dma.hbm_to_vmem [thread:$0]  %s37, 256, %s39, [#allocation6], 128, 128, 8
    $region9: #{tpu_custom_call.1} parent=1 // pred_fallthru
      _
    // Predicated region
    $region10: #{tpu_custom_call.1} parent=1 // pred_check
      _
    $region11: #{tpu_custom_call.1} parent=1 // pred_check_branch
      %46 = sbr.rel (0) target = $region13
    $region12: #{tpu_custom_call.1} parent=1 // pred_region
      %48 = vsyncadd [#allocation6], 0
      %s49 = sshll.u32 %s2, 4
      %s50 = int_to_ptr.hbm [resolvable:$true] %s49
      %s51 = sshll.u32 [#allocation7], 4
      %s52 = int_to_ptr.vmem [resolvable:$true] %s51
      %57 = dma.hbm_to_vmem [thread:$0]  %s50, 256, %s52, [#allocation6], 128, 128, 8
    $region13: #{tpu_custom_call.1} parent=1 // pred_fallthru
      _
    // Predicated region
    $region14: #{tpu_custom_call.1} parent=1 // pred_check
      _
    $region15: #{tpu_custom_call.1} parent=1 // pred_check_branch
      %59 = sbr.rel (0) target = $region17
    $region16: #{tpu_custom_call.1} parent=1 // pred_region
      %61 = vsyncadd [#allocation9], 0
      %s62 = sshll.u32 %s3, 4
      %s63 = int_to_ptr.hbm [resolvable:$true] %s62
      %s64 = sshll.u32 [#allocation8], 4
      %s65 = int_to_ptr.vmem [resolvable:$true] %s64
      %70 = dma.hbm_to_vmem [thread:$0]  %s63, 256, %s65, [#allocation9], 128, 128, 8
    $region17: #{tpu_custom_call.1} parent=1 // pred_fallthru
      _
    // Predicated region
    $region18: #{tpu_custom_call.1} parent=1 // pred_check
      _
    $region19: #{tpu_custom_call.1} parent=1 // pred_check_branch
      %72 = sbr.rel (0) target = $region21
    $region20: #{tpu_custom_call.1} parent=1 // pred_region
      _
    $region21: #{tpu_custom_call.1} parent=1 // pred_fallthru
      _
    // Predicated region
    $region22: #{tpu_custom_call.1} parent=1 // pred_check
      _
    $region23: #{tpu_custom_call.1} parent=1 // pred_check_branch
      %74 = sbr.rel (0) target = $region25
    $region24: #{tpu_custom_call.1} parent=1 // pred_region
      _
    $region25: #{tpu_custom_call.1} parent=1 // pred_fallthru
      _
    // Predicated region
    $region26: #{tpu_custom_call.1} parent=1 // pred_check
      _
    $region27: #{tpu_custom_call.1} parent=1 // pred_check_branch
      %76 = sbr.rel (0) target = $region29
    $region28: #{tpu_custom_call.1} parent=1 // pred_region
      _
    $region29: #{tpu_custom_call.1} parent=1 // pred_fallthru
      _
    // Predicated region
    $region30: #{tpu_custom_call.1} parent=1 // pred_check
      _
    $region31: #{tpu_custom_call.1} parent=1 // pred_check_branch
      %78 = sbr.rel (0) target = $region33
    $region32: #{tpu_custom_call.1} parent=1 // pred_region
      %80 = vsyncadd [#allocation9], 0
      %s81 = sshll.u32 %s7, 4
      %s82 = int_to_ptr.hbm [resolvable:$true] %s81
      %s83 = sshll.u32 [#allocation10], 4
      %s84 = int_to_ptr.vmem [resolvable:$true] %s83
      %89 = dma.hbm_to_vmem [thread:$0]  %s82, 512, %s84, [#allocation9], 128, 128, 8
    $region33: #{tpu_custom_call.1} parent=1 // pred_fallthru
      _
    // Predicated region
    $region34: #{tpu_custom_call.1} parent=1 // pred_check
      _
    $region35: #{tpu_custom_call.1} parent=1 // pred_check_branch
      %91 = sbr.rel (0) target = $region37
    $region36: #{tpu_custom_call.1} parent=1 // pred_region
      _
    $region37: #{tpu_custom_call.1} parent=1 // pred_fallthru
      _
    // Predicated region
    $region38: #{tpu_custom_call.1} parent=1 // pred_check
      _
    $region39: #{tpu_custom_call.1} parent=1 // pred_check_branch
      %93 = sbr.rel (0) target = $region41
    $region40: #{tpu_custom_call.1} parent=1 // pred_region
      _
    $region41: #{tpu_custom_call.1} parent=1 // pred_fallthru
      _
    // Predicated region
    $region42: #{tpu_custom_call.1} parent=1 // pred_check
      _
    $region43: #{tpu_custom_call.1} parent=1 // pred_check_branch
      %95 = sbr.rel (0) target = $region45
    $region44: #{tpu_custom_call.1} parent=1 // pred_region
      %97 = dma.done [#allocation3], 256
    $region45: #{tpu_custom_call.1} parent=1 // pred_fallthru
      _
    // Predicated region
    $region46: #{tpu_custom_call.1} parent=1 // pred_check
      _
    $region47: #{tpu_custom_call.1} parent=1 // pred_check_branch
      %99 = sbr.rel (0) target = $region49
    $region48: #{tpu_custom_call.1} parent=1 // pred_region
      %101 = dma.done [#allocation6], 256
    $region49: #{tpu_custom_call.1} parent=1 // pred_fallthru
      _
    // Predicated region
    $region50: #{tpu_custom_call.1} parent=1 // pred_check
      _
    $region51: #{tpu_custom_call.1} parent=1 // pred_check_branch
      %103 = sbr.rel (0) target = $region53
    $region52: #{tpu_custom_call.1} parent=1 // pred_region
      %105 = dma.done [#allocation6], 256
    $region53: #{tpu_custom_call.1} parent=1 // pred_fallthru
      _
    // Predicated region
    $region54: #{tpu_custom_call.1} parent=1 // pred_check
      _
    $region55: #{tpu_custom_call.1} parent=1 // pred_check_branch
      %107 = sbr.rel (0) target = $region57
    $region56: #{tpu_custom_call.1} parent=1 // pred_region
      %109 = dma.done [#allocation9], 256
    $region57: #{tpu_custom_call.1} parent=1 // pred_fallthru
      _
    // Predicated region
    $region58: #{tpu_custom_call.1} parent=1 // pred_check
      _
    $region59: #{tpu_custom_call.1} parent=1 // pred_check_branch
      %111 = sbr.rel (0) target = $region61
    $region60: #{tpu_custom_call.1} parent=1 // pred_region
      %113 = dma.done [#allocation9], 512
    $region61: #{tpu_custom_call.1} parent=1 // pred_fallthru
      _
    %v114 = vld [vmem:[#allocation2] sm:$0xff]
    %v115 = vld [vmem:[#allocation2 + $0x8] sm:$0xff]
    %v116 = vld [vmem:[%s4] sm:$0x1]
    %v117 = vmul.f32 %v114, %v114
    %v118 = vmul.f32 %v115, %v115
    %vm119 = vcmask 261120
    %v120 = vsel %vm119, %v117, 0.0
    %121 = vadd.xlane.f32.xlu0 %v120
    %v122 = vpop.xlane.xlu0 %121
    %v123 = vsel %vm119, %v118, 0.0
    %124 = vadd.xlane.f32.xlu0 %v123
    %v125 = vpop.xlane.xlu0 %124
    %v126 = vrcp.pop 32.0
    %v127 = vmul.f32 32.0, %v126
    %v128 = vsub.f32 1.0, %v127
    %v129 = vmul.f32 %v126, %v128
    %v130 = vadd.f32 %v126, %v129
    %vm131 = vweird.f32 %v126
    %v132 = vsel %vm131, %v126, %v130
    %v133 = vmul.f32 %v122, %v132
    %v134 = vmul.f32 %v125, %v132
    %v135 = vadd.f32 %v133, 1e-05
    %v136 = vadd.f32 %v134, 1e-05
    %v137 = vrsqrt.pop %v135
    %v138 = vmul.f32 %v137, %v135
    %v139 = vmul.f32 %v138, %v137
    %v140 = vmul.f32 0.5, %v139
    %v141 = vsub.f32 1.5, %v140
    %v142 = vmul.f32 %v137, %v141
    %vm143 = vweird.f32 %v135
    %vm144 = vweird.f32 %v137
    %vm145 = vmor %vm143, %vm144
    %v146 = vsel %vm145, %v137, %v142
    %v147 = vrsqrt.pop %v136
    %v148 = vmul.f32 %v147, %v136
    %v149 = vmul.f32 %v148, %v147
    %v150 = vmul.f32 0.5, %v149
    %v151 = vsub.f32 1.5, %v150
    %v152 = vmul.f32 %v147, %v151
    %vm153 = vweird.f32 %v136
    %vm154 = vweird.f32 %v147
    %vm155 = vmor %vm153, %vm154
    %v156 = vsel %vm155, %v147, %v152
    %v157 = vmul.f32 %v114, %v146
    %v158 = vmul.f32 %v115, %v156
    %v160 = vperm.slane %v116, 0
    %v162 = vmul.f32 %v157, %v160
    %v163 = vmul.f32 %v158, %v160
    %v164 = vld [vmem:[%s6] sm:$0xff]
    %v165 = vld [vmem:[%s6 + $0x8] sm:$0xff]
    %v166 = vld [vmem:[%s6 + $0x10] sm:$0xff]
    %v167 = vld [vmem:[%s6 + $0x18] sm:$0xff]
    %v168 = vld [vmem:[%s6 + $0x20] sm:$0xff]
    %v169 = vld [vmem:[%s6 + $0x28] sm:$0xff]
    %v170 = vld [vmem:[%s6 + $0x30] sm:$0xff]
    %v171 = vld [vmem:[%s6 + $0x38] sm:$0xff]
    %v173 = vsel %vm119, %v162, 0
    %v176 = vsel %vm119, %v163, 0
    %178 = vmatpush.msra.mxu0 0.0
    %179 = vmatpush.msra.mxu0 0.0
    %180 = vmatpush.msra.mxu0 0.0
    %181 = vmatpush.msra.mxu0 0.0
    %182 = vmatpush.msra.mxu0 0.0
    %183 = vmatpush.msra.mxu0 0.0
    %184 = vmatpush.msra.mxu0 0.0
    %185 = vmatpush.msra.mxu0 0.0
    %186 = vmatpush.msra.mxu0 0.0
    %187 = vmatpush.msra.mxu0 0.0
    %188 = vmatpush.msra.mxu0 0.0
    %189 = vmatpush.msra.mxu0 0.0
    %190 = vmatpush.msra.mxu0 %v170
    %191 = vmatpush.msra.mxu0 %v168
    %192 = vmatpush.msra.mxu0 %v166
    %193 = vmatpush.msra.mxu0 %v164
    %194 = vmatmul.f32.gmra.mxu0 %v173
    %v195 = vpop.f32.mrf.mxu0
    %v196 = vadd.f32 0.0, %v195
    %197 = vmatmul.f32.gmra.mxu0 %v176
    %v198 = vpop.f32.mrf.mxu0
    %v199 = vadd.f32 0.0, %v198
    %200 = vdwg.mxu0
    %201 = vmatpush.msra.mxu0 0.0
    %202 = vmatpush.msra.mxu0 0.0
    %203 = vmatpush.msra.mxu0 0.0
    %204 = vmatpush.msra.mxu0 0.0
    %205 = vmatpush.msra.mxu0 0.0
    %206 = vmatpush.msra.mxu0 0.0
    %207 = vmatpush.msra.mxu0 0.0
    %208 = vmatpush.msra.mxu0 0.0
    %209 = vmatpush.msra.mxu0 0.0
    %210 = vmatpush.msra.mxu0 0.0
    %211 = vmatpush.msra.mxu0 0.0
    %212 = vmatpush.msra.mxu0 0.0
    %213 = vmatpush.msra.mxu0 %v171
    %214 = vmatpush.msra.mxu0 %v169
    %215 = vmatpush.msra.mxu0 %v167
    %216 = vmatpush.msra.mxu0 %v165
    %217 = vmatmul.f32.gmra.mxu0 %v173
    %v218 = vpop.f32.mrf.mxu0
    %v219 = vadd.f32 0.0, %v218
    %220 = vmatmul.f32.gmra.mxu0 %v176
    %v221 = vpop.f32.mrf.mxu0
    %v222 = vadd.f32 0.0, %v221
    %223 = vdwg.mxu0
    %v224 = vld [vmem:[#allocation7] sm:$0xff]
    %v225 = vld [vmem:[#allocation7 + $0x8] sm:$0xff]
    %v226 = vld [vmem:[#allocation8] sm:$0xff]
    %v227 = vld [vmem:[#allocation8 + $0x8] sm:$0xff]
    %v228 = vmul.f32 %v196, %v224
    %v229 = vmul.f32 %v199, %v225
    %232 = vrot.lane.b32.xlu0 %v226, 32
    %v233 = vpop.permute.xlu0 %232
    %234 = vrot.lane.b32.xlu0 %v227, 32
    %v235 = vpop.permute.xlu0 %234
    %v238 = vmul.f32 %v196, %v233
    %v239 = vmul.f32 %v199, %v235
    %242 = vrot.lane.b32.xlu0 %v238, 96
    %v243 = vpop.permute.xlu0 %242
    %244 = vrot.lane.b32.xlu0 %v239, 96
    %v245 = vpop.permute.xlu0 %244
    %v248 = vadd.f32 %v228, %v243
    %v249 = vadd.f32 %v229, %v245
    %252 = vrot.lane.b32.xlu0 %v224, 64
    %v253 = vpop.permute.xlu0 %252
    %254 = vrot.lane.b32.xlu0 %v225, 64
    %v255 = vpop.permute.xlu0 %254
    %v258 = vmul.f32 %v196, %v253
    %v259 = vmul.f32 %v199, %v255
    %260 = vrot.lane.b32.xlu0 %v226, 96
    %v261 = vpop.permute.xlu0 %260
    %262 = vrot.lane.b32.xlu0 %v227, 96
    %v263 = vpop.permute.xlu0 %262
    %v266 = vmul.f32 %v196, %v261
    %v267 = vmul.f32 %v199, %v263
    %270 = vrot.lane.b32.xlu0 %v266, 96
    %v271 = vpop.permute.xlu0 %270
    %272 = vrot.lane.b32.xlu0 %v267, 96
    %v273 = vpop.permute.xlu0 %272
    %v276 = vadd.f32 %v258, %v271
    %v277 = vadd.f32 %v259, %v273
    %280 = vrot.lane.b32.xlu0 %v248, 120
    %v281 = vpop.permute.xlu0 %280
    %282 = vrot.lane.b32.xlu0 %v249, 120
    %v283 = vpop.permute.xlu0 %282
    %284 = vrot.lane.b32.xlu0 %v248, 112
    %v285 = vpop.permute.xlu0 %284
    %286 = vrot.lane.b32.xlu0 %v249, 112
    %v287 = vpop.permute.xlu0 %286
    %288 = vrot.lane.b32.xlu0 %v248, 104
    %v289 = vpop.permute.xlu0 %288
    %290 = vrot.lane.b32.xlu0 %v249, 104
    %v291 = vpop.permute.xlu0 %290
    %294 = vrot.lane.b32.xlu0 %v276, 120
    %v295 = vpop.permute.xlu0 %294
    %296 = vrot.lane.b32.xlu0 %v277, 120
    %v297 = vpop.permute.xlu0 %296
    %298 = vrot.lane.b32.xlu0 %v276, 112
    %v299 = vpop.permute.xlu0 %298
    %300 = vrot.lane.b32.xlu0 %v277, 112
    %v301 = vpop.permute.xlu0 %300
    %302 = vrot.lane.b32.xlu0 %v276, 104
    %v303 = vpop.permute.xlu0 %302
    %304 = vrot.lane.b32.xlu0 %v277, 104
    %v305 = vpop.permute.xlu0 %304
    %308 = vrot.lane.b32.xlu0 %v219, 120
    %v309 = vpop.permute.xlu0 %308
    %310 = vrot.lane.b32.xlu0 %v222, 120
    %v311 = vpop.permute.xlu0 %310
    %314 = vrot.lane.b32.xlu0 %v219, 112
    %v315 = vpop.permute.xlu0 %314
    %316 = vrot.lane.b32.xlu0 %v222, 112
    %v317 = vpop.permute.xlu0 %316
    %320 = vrot.lane.b32.xlu0 %v219, 104
    %v321 = vpop.permute.xlu0 %320
    %322 = vrot.lane.b32.xlu0 %v222, 104
    %v323 = vpop.permute.xlu0 %322
    %v326 = vld [vmem:[#allocation5] sm:$0xff]
    %v327 = vld [vmem:[#allocation5 + $0x8] sm:$0xff]
    %328 = vrot.lane.b32.xlu0 %v276, 64
    %v329 = vpop.permute.xlu0 %328
    %330 = vrot.lane.b32.xlu0 %v277, 64
    %v331 = vpop.permute.xlu0 %330
    %vm332 = vcmask 64512
    %v333 = vsel %vm332, %v248, 0
    %v335 = vsel %vm332, %v249, 0
    %v337 = vsel %vm332, %v329, 0
    %v339 = vsel %vm332, %v331, 0
    %341 = vmatpush.xpose.msra.mxu0 0.0
    %342 = vmatpush.xpose.msra.mxu0 0.0
    %343 = vmatpush.xpose.msra.mxu0 0.0
    %344 = vmatpush.xpose.msra.mxu0 0.0
    %345 = vmatpush.xpose.msra.mxu0 0.0
    %346 = vmatpush.xpose.msra.mxu0 0.0
    %347 = vmatpush.xpose.msra.mxu0 0.0
    %348 = vmatpush.xpose.msra.mxu0 0.0
    %349 = vmatpush.xpose.msra.mxu0 0.0
    %350 = vmatpush.xpose.msra.mxu0 0.0
    %351 = vmatpush.xpose.msra.mxu0 0.0
    %352 = vmatpush.xpose.msra.mxu0 0.0
    %353 = vmatpush.xpose.msra.mxu0 0.0
    %354 = vmatpush.xpose.msra.mxu0 0.0
    %355 = vmatpush.xpose.msra.mxu0 %v339
    %356 = vmatpush.xpose.msra.mxu0 %v337
    %357 = vmatmul.f32.gmra.mxu0 %v333
    %v358 = vpop.f32.mrf.mxu0
    %v359 = vadd.f32 %v326, %v358
    %360 = vmatmul.f32.gmra.mxu0 %v335
    %v361 = vpop.f32.mrf.mxu0
    %v362 = vadd.f32 %v327, %v361
    %363 = vdwg.mxu0
    %364 = vrot.lane.b32.xlu0 %v295, 64
    %v365 = vpop.permute.xlu0 %364
    %366 = vrot.lane.b32.xlu0 %v297, 64
    %v367 = vpop.permute.xlu0 %366
    %v368 = vsel %vm332, %v281, 0
    %v370 = vsel %vm332, %v283, 0
    %v372 = vsel %vm332, %v365, 0
    %v374 = vsel %vm332, %v367, 0
    %376 = vmatpush.xpose.msra.mxu0 0.0
    %377 = vmatpush.xpose.msra.mxu0 0.0
    %378 = vmatpush.xpose.msra.mxu0 0.0
    %379 = vmatpush.xpose.msra.mxu0 0.0
    %380 = vmatpush.xpose.msra.mxu0 0.0
    %381 = vmatpush.xpose.msra.mxu0 0.0
    %382 = vmatpush.xpose.msra.mxu0 0.0
    %383 = vmatpush.xpose.msra.mxu0 0.0
    %384 = vmatpush.xpose.msra.mxu0 0.0
    %385 = vmatpush.xpose.msra.mxu0 0.0
    %386 = vmatpush.xpose.msra.mxu0 0.0
    %387 = vmatpush.xpose.msra.mxu0 0.0
    %388 = vmatpush.xpose.msra.mxu0 0.0
    %389 = vmatpush.xpose.msra.mxu0 0.0
    %390 = vmatpush.xpose.msra.mxu0 %v374
    %391 = vmatpush.xpose.msra.mxu0 %v372
    %392 = vmatmul.f32.gmra.mxu0 %v368
    %v393 = vpop.f32.mrf.mxu0
    %v394 = vadd.f32 %v326, %v393
    %395 = vmatmul.f32.gmra.mxu0 %v370
    %v396 = vpop.f32.mrf.mxu0
    %v397 = vadd.f32 %v327, %v396
    %398 = vdwg.mxu0
    %399 = vrot.lane.b32.xlu0 %v299, 64
    %v400 = vpop.permute.xlu0 %399
    %401 = vrot.lane.b32.xlu0 %v301, 64
    %v402 = vpop.permute.xlu0 %401
    %v403 = vsel %vm332, %v285, 0
    %v405 = vsel %vm332, %v287, 0
    %v407 = vsel %vm332, %v400, 0
    %v409 = vsel %vm332, %v402, 0
    %411 = vmatpush.xpose.msra.mxu0 0.0
    %412 = vmatpush.xpose.msra.mxu0 0.0
    %413 = vmatpush.xpose.msra.mxu0 0.0
    %414 = vmatpush.xpose.msra.mxu0 0.0
    %415 = vmatpush.xpose.msra.mxu0 0.0
    %416 = vmatpush.xpose.msra.mxu0 0.0
    %417 = vmatpush.xpose.msra.mxu0 0.0
    %418 = vmatpush.xpose.msra.mxu0 0.0
    %419 = vmatpush.xpose.msra.mxu0 0.0
    %420 = vmatpush.xpose.msra.mxu0 0.0
    %421 = vmatpush.xpose.msra.mxu0 0.0
    %422 = vmatpush.xpose.msra.mxu0 0.0
    %423 = vmatpush.xpose.msra.mxu0 0.0
    %424 = vmatpush.xpose.msra.mxu0 0.0
    %425 = vmatpush.xpose.msra.mxu0 %v409
    %426 = vmatpush.xpose.msra.mxu0 %v407
    %427 = vmatmul.f32.gmra.mxu0 %v403
    %v428 = vpop.f32.mrf.mxu0
    %v429 = vadd.f32 %v326, %v428
    %430 = vmatmul.f32.gmra.mxu0 %v405
    %v431 = vpop.f32.mrf.mxu0
    %v432 = vadd.f32 %v327, %v431
    %433 = vdwg.mxu0
    %434 = vrot.lane.b32.xlu0 %v303, 64
    %v435 = vpop.permute.xlu0 %434
    %436 = vrot.lane.b32.xlu0 %v305, 64
    %v437 = vpop.permute.xlu0 %436
    %v438 = vsel %vm332, %v289, 0
    %v440 = vsel %vm332, %v291, 0
    %v442 = vsel %vm332, %v435, 0
    %v444 = vsel %vm332, %v437, 0
    %446 = vmatpush.xpose.msra.mxu0 0.0
    %447 = vmatpush.xpose.msra.mxu0 0.0
    %448 = vmatpush.xpose.msra.mxu0 0.0
    %449 = vmatpush.xpose.msra.mxu0 0.0
    %450 = vmatpush.xpose.msra.mxu0 0.0
    %451 = vmatpush.xpose.msra.mxu0 0.0
    %452 = vmatpush.xpose.msra.mxu0 0.0
    %453 = vmatpush.xpose.msra.mxu0 0.0
    %454 = vmatpush.xpose.msra.mxu0 0.0
    %455 = vmatpush.xpose.msra.mxu0 0.0
    %456 = vmatpush.xpose.msra.mxu0 0.0
    %457 = vmatpush.xpose.msra.mxu0 0.0
    %458 = vmatpush.xpose.msra.mxu0 0.0
    %459 = vmatpush.xpose.msra.mxu0 0.0
    %460 = vmatpush.xpose.msra.mxu0 %v444
    %461 = vmatpush.xpose.msra.mxu0 %v442
    %462 = vmatmul.f32.gmra.mxu0 %v438
    %v463 = vpop.f32.mrf.mxu0
    %v464 = vadd.f32 %v326, %v463
    %465 = vmatmul.f32.gmra.mxu0 %v440
    %v466 = vpop.f32.mrf.mxu0
    %v467 = vadd.f32 %v327, %v466
    %468 = vdwg.mxu0
    %vm469 = vcmask 130048
    %v470 = vsel %vm469, %v359, -inf
    %471 = vmax.xlane.f32.xlu0 %v470
    %v472 = vpop.xlane.xlu0 %471
    %v473 = vsel %vm469, %v362, -inf
    %474 = vmax.xlane.f32.xlu0 %v473
    %v475 = vpop.xlane.xlu0 %474
    %v476 = vsel %vm469, %v394, -inf
    %477 = vmax.xlane.f32.xlu0 %v476
    %v478 = vpop.xlane.xlu0 %477
    %v479 = vsel %vm469, %v397, -inf
    %480 = vmax.xlane.f32.xlu0 %v479
    %v481 = vpop.xlane.xlu0 %480
    %v482 = vsel %vm469, %v429, -inf
    %483 = vmax.xlane.f32.xlu0 %v482
    %v484 = vpop.xlane.xlu0 %483
    %v485 = vsel %vm469, %v432, -inf
    %486 = vmax.xlane.f32.xlu0 %v485
    %v487 = vpop.xlane.xlu0 %486
    %v488 = vsel %vm469, %v464, -inf
    %489 = vmax.xlane.f32.xlu0 %v488
    %v490 = vpop.xlane.xlu0 %489
    %v491 = vsel %vm469, %v467, -inf
    %492 = vmax.xlane.f32.xlu0 %v491
    %v493 = vpop.xlane.xlu0 %492
    %v494 = vsub.f32 %v359, %v472
    %v495 = vsub.f32 %v362, %v475
    %v496 = vsub.f32 %v394, %v478
    %v497 = vsub.f32 %v397, %v481
    %v498 = vsub.f32 %v429, %v484
    %v499 = vsub.f32 %v432, %v487
    %v500 = vsub.f32 %v464, %v490
    %v501 = vsub.f32 %v467, %v493
    %v502 = vmul.f32 %v494, 1.442695
    %v503 = vpow.pop %v502
    %v504 = vmul.f32 %v495, 1.442695
    %v505 = vpow.pop %v504
    %v506 = vmul.f32 %v496, 1.442695
    %v507 = vpow.pop %v506
    %v508 = vmul.f32 %v497, 1.442695
    %v509 = vpow.pop %v508
    %v510 = vmul.f32 %v498, 1.442695
    %v511 = vpow.pop %v510
    %v512 = vmul.f32 %v499, 1.442695
    %v513 = vpow.pop %v512
    %v514 = vmul.f32 %v500, 1.442695
    %v515 = vpow.pop %v514
    %v516 = vmul.f32 %v501, 1.442695
    %v517 = vpow.pop %v516
    %v518 = vsel %vm469, %v503, 0.0
    %519 = vadd.xlane.f32.xlu0 %v518
    %v520 = vpop.xlane.xlu0 %519
    %v521 = vsel %vm469, %v505, 0.0
    %522 = vadd.xlane.f32.xlu0 %v521
    %v523 = vpop.xlane.xlu0 %522
    %v524 = vsel %vm469, %v507, 0.0
    %525 = vadd.xlane.f32.xlu0 %v524
    %v526 = vpop.xlane.xlu0 %525
    %v527 = vsel %vm469, %v509, 0.0
    %528 = vadd.xlane.f32.xlu0 %v527
    %v529 = vpop.xlane.xlu0 %528
    %v530 = vsel %vm469, %v511, 0.0
    %531 = vadd.xlane.f32.xlu0 %v530
    %v532 = vpop.xlane.xlu0 %531
    %v533 = vsel %vm469, %v513, 0.0
    %534 = vadd.xlane.f32.xlu0 %v533
    %v535 = vpop.xlane.xlu0 %534
    %v536 = vsel %vm469, %v515, 0.0
    %537 = vadd.xlane.f32.xlu0 %v536
    %v538 = vpop.xlane.xlu0 %537
    %v539 = vsel %vm469, %v517, 0.0
    %540 = vadd.xlane.f32.xlu0 %v539
    %v541 = vpop.xlane.xlu0 %540
    %v542 = vrcp.pop %v520
    %v543 = vrcp.pop %v523
    %v544 = vrcp.pop %v526
    %v545 = vrcp.pop %v529
    %v546 = vrcp.pop %v532
    %v547 = vrcp.pop %v535
    %v548 = vrcp.pop %v538
    %v549 = vrcp.pop %v541
    %v550 = vmul.f32 %v503, %v542
    %v551 = vmul.f32 %v505, %v543
    %v552 = vmul.f32 %v507, %v544
    %v553 = vmul.f32 %v509, %v545
    %v554 = vmul.f32 %v511, %v546
    %v555 = vmul.f32 %v513, %v547
    %v556 = vmul.f32 %v515, %v548
    %v557 = vmul.f32 %v517, %v549
    %v559 = vsel %vm469, %v550, 0
    %v562 = vsel %vm469, %v551, 0
    %564 = vmatpush.msra.mxu0 0.0
    %565 = vmatpush.msra.mxu0 0.0
    %566 = vmatpush.msra.mxu0 0.0
    %567 = vmatpush.msra.mxu0 0.0
    %568 = vmatpush.msra.mxu0 0.0
    %569 = vmatpush.msra.mxu0 0.0
    %570 = vmatpush.msra.mxu0 0.0
    %571 = vmatpush.msra.mxu0 0.0
    %572 = vmatpush.msra.mxu0 0.0
    %573 = vmatpush.msra.mxu0 0.0
    %574 = vmatpush.msra.mxu0 0.0
    %575 = vmatpush.msra.mxu0 0.0
    %576 = vmatpush.msra.mxu0 0.0
    %577 = vmatpush.msra.mxu0 0.0
    %578 = vmatpush.msra.mxu0 %v222
    %579 = vmatpush.msra.mxu0 %v219
    %580 = vmatmul.f32.gmra.mxu0 %v559
    %v581 = vpop.f32.mrf.mxu0
    %v582 = vadd.f32 0.0, %v581
    %583 = vmatmul.f32.gmra.mxu0 %v562
    %v584 = vpop.f32.mrf.mxu0
    %v585 = vadd.f32 0.0, %v584
    %586 = vdwg.mxu0
    %v588 = vsel %vm469, %v552, 0
    %v591 = vsel %vm469, %v553, 0
    %593 = vmatpush.msra.mxu0 0.0
    %594 = vmatpush.msra.mxu0 0.0
    %595 = vmatpush.msra.mxu0 0.0
    %596 = vmatpush.msra.mxu0 0.0
    %597 = vmatpush.msra.mxu0 0.0
    %598 = vmatpush.msra.mxu0 0.0
    %599 = vmatpush.msra.mxu0 0.0
    %600 = vmatpush.msra.mxu0 0.0
    %601 = vmatpush.msra.mxu0 0.0
    %602 = vmatpush.msra.mxu0 0.0
    %603 = vmatpush.msra.mxu0 0.0
    %604 = vmatpush.msra.mxu0 0.0
    %605 = vmatpush.msra.mxu0 0.0
    %606 = vmatpush.msra.mxu0 0.0
    %607 = vmatpush.msra.mxu0 %v311
    %608 = vmatpush.msra.mxu0 %v309
    %609 = vmatmul.f32.gmra.mxu0 %v588
    %v610 = vpop.f32.mrf.mxu0
    %v611 = vadd.f32 0.0, %v610
    %612 = vmatmul.f32.gmra.mxu0 %v591
    %v613 = vpop.f32.mrf.mxu0
    %v614 = vadd.f32 0.0, %v613
    %615 = vdwg.mxu0
    %v617 = vsel %vm469, %v554, 0
    %v620 = vsel %vm469, %v555, 0
    %622 = vmatpush.msra.mxu0 0.0
    %623 = vmatpush.msra.mxu0 0.0
    %624 = vmatpush.msra.mxu0 0.0
    %625 = vmatpush.msra.mxu0 0.0
    %626 = vmatpush.msra.mxu0 0.0
    %627 = vmatpush.msra.mxu0 0.0
    %628 = vmatpush.msra.mxu0 0.0
    %629 = vmatpush.msra.mxu0 0.0
    %630 = vmatpush.msra.mxu0 0.0
    %631 = vmatpush.msra.mxu0 0.0
    %632 = vmatpush.msra.mxu0 0.0
    %633 = vmatpush.msra.mxu0 0.0
    %634 = vmatpush.msra.mxu0 0.0
    %635 = vmatpush.msra.mxu0 0.0
    %636 = vmatpush.msra.mxu0 %v317
    %637 = vmatpush.msra.mxu0 %v315
    %638 = vmatmul.f32.gmra.mxu0 %v617
    %v639 = vpop.f32.mrf.mxu0
    %v640 = vadd.f32 0.0, %v639
    %641 = vmatmul.f32.gmra.mxu0 %v620
    %v642 = vpop.f32.mrf.mxu0
    %v643 = vadd.f32 0.0, %v642
    %644 = vdwg.mxu0
    %v646 = vsel %vm469, %v556, 0
    %v649 = vsel %vm469, %v557, 0
    %651 = vmatpush.msra.mxu0 0.0
    %652 = vmatpush.msra.mxu0 0.0
    %653 = vmatpush.msra.mxu0 0.0
    %654 = vmatpush.msra.mxu0 0.0
    %655 = vmatpush.msra.mxu0 0.0
    %656 = vmatpush.msra.mxu0 0.0
    %657 = vmatpush.msra.mxu0 0.0
    %658 = vmatpush.msra.mxu0 0.0
    %659 = vmatpush.msra.mxu0 0.0
    %660 = vmatpush.msra.mxu0 0.0
    %661 = vmatpush.msra.mxu0 0.0
    %662 = vmatpush.msra.mxu0 0.0
    %663 = vmatpush.msra.mxu0 0.0
    %664 = vmatpush.msra.mxu0 0.0
    %665 = vmatpush.msra.mxu0 %v323
    %666 = vmatpush.msra.mxu0 %v321
    %667 = vmatmul.f32.gmra.mxu0 %v646
    %v668 = vpop.f32.mrf.mxu0
    %v669 = vadd.f32 0.0, %v668
    %670 = vmatmul.f32.gmra.mxu0 %v649
    %v671 = vpop.f32.mrf.mxu0
    %v672 = vadd.f32 0.0, %v671
    %673 = vdwg.mxu0
    %676 = vrot.lane.b32.xlu0 %v611, 8
    %v677 = vpop.permute.xlu0 %676
    %678 = vrot.lane.b32.xlu0 %v614, 8
    %v679 = vpop.permute.xlu0 %678
    %684 = vrot.lane.b32.xlu0 %v640, 16
    %v685 = vpop.permute.xlu0 %684
    %686 = vrot.lane.b32.xlu0 %v643, 16
    %v687 = vpop.permute.xlu0 %686
    %692 = vrot.lane.b32.xlu0 %v669, 24
    %v693 = vpop.permute.xlu0 %692
    %694 = vrot.lane.b32.xlu0 %v672, 24
    %v695 = vpop.permute.xlu0 %694
    %v698 = vsel %vm332, %v582, %v677
    %v699 = vsel %vm332, %v585, %v679
    %v700 = vsel %vm469, %v698, %v685
    %v701 = vsel %vm469, %v699, %v687
    %vm702 = vcmask 195584
    %v703 = vsel %vm702, %v700, %v693
    %v704 = vsel %vm702, %v701, %v695
    %v705 = vld [vmem:[#allocation10] sm:$0xff]
    %v706 = vld [vmem:[#allocation10 + $0x8] sm:$0xff]
    %v707 = vld [vmem:[#allocation10 + $0x10] sm:$0xff]
    %v708 = vld [vmem:[#allocation10 + $0x18] sm:$0xff]
    %v710 = vsel %vm119, %v703, 0
    %v713 = vsel %vm119, %v704, 0
    %715 = vmatpush.msra.mxu0 0.0
    %716 = vmatpush.msra.mxu0 0.0
    %717 = vmatpush.msra.mxu0 0.0
    %718 = vmatpush.msra.mxu0 0.0
    %719 = vmatpush.msra.mxu0 0.0
    %720 = vmatpush.msra.mxu0 0.0
    %721 = vmatpush.msra.mxu0 0.0
    %722 = vmatpush.msra.mxu0 0.0
    %723 = vmatpush.msra.mxu0 0.0
    %724 = vmatpush.msra.mxu0 0.0
    %725 = vmatpush.msra.mxu0 0.0
    %726 = vmatpush.msra.mxu0 0.0
    %727 = vmatpush.msra.mxu0 %v708
    %728 = vmatpush.msra.mxu0 %v707
    %729 = vmatpush.msra.mxu0 %v706
    %730 = vmatpush.msra.mxu0 %v705
    %731 = vmatmul.f32.gmra.mxu0 %v710
    %v732 = vpop.f32.mrf.mxu0
    %v733 = vadd.f32 0.0, %v732
    %734 = vmatmul.f32.gmra.mxu0 %v713
    %v735 = vpop.f32.mrf.mxu0
    %v736 = vadd.f32 0.0, %v735
    %737 = vdwg.mxu0
    %v738 = vadd.f32 %v114, %v733
    %v739 = vadd.f32 %v115, %v736
    %v740 = vld [vmem:[%s5] sm:$0x1]
    %v741 = vmul.f32 %v738, %v738
    %v742 = vmul.f32 %v739, %v739
    %v743 = vsel %vm119, %v741, 0.0
    %744 = vadd.xlane.f32.xlu0 %v743
    %v745 = vpop.xlane.xlu0 %744
    %v746 = vsel %vm119, %v742, 0.0
    %747 = vadd.xlane.f32.xlu0 %v746
    %v748 = vpop.xlane.xlu0 %747
    %v749 = vmul.f32 %v745, %v132
    %v750 = vmul.f32 %v748, %v132
    %v751 = vadd.f32 %v749, 1e-05
    %v752 = vadd.f32 %v750, 1e-05
    %v753 = vrsqrt.pop %v751
    %v754 = vmul.f32 %v753, %v751
    %v755 = vmul.f32 %v754, %v753
    %v756 = vmul.f32 0.5, %v755
    %v757 = vsub.f32 1.5, %v756
    %v758 = vmul.f32 %v753, %v757
    %vm759 = vweird.f32 %v751
    %vm760 = vweird.f32 %v753
    %vm761 = vmor %vm759, %vm760
    %v762 = vsel %vm761, %v753, %v758
    %v763 = vrsqrt.pop %v752
    %v764 = vmul.f32 %v763, %v752
    %v765 = vmul.f32 %v764, %v763
    %v766 = vmul.f32 0.5, %v765
    %v767 = vsub.f32 1.5, %v766
    %v768 = vmul.f32 %v763, %v767
    %vm769 = vweird.f32 %v752
    %vm770 = vweird.f32 %v763
    %vm771 = vmor %vm769, %vm770
    %v772 = vsel %vm771, %v763, %v768
    %v773 = vmul.f32 %v738, %v762
    %v774 = vmul.f32 %v739, %v772
    %v776 = vperm.slane %v740, 0
    %v778 = vmul.f32 %v773, %v776
    %v779 = vmul.f32 %v774, %v776
    %v780 = vld [vmem:[%s8] sm:$0xff]
    %v781 = vld [vmem:[%s8 + $0x8] sm:$0xff]
    %v782 = vld [vmem:[%s8 + $0x10] sm:$0xff]
    %v783 = vld [vmem:[%s8 + $0x18] sm:$0xff]
    %v784 = vld [vmem:[%s8 + $0x20] sm:$0xff]
    %v785 = vld [vmem:[%s8 + $0x28] sm:$0xff]
    %v786 = vld [vmem:[%s8 + $0x30] sm:$0xff]
    %v787 = vld [vmem:[%s8 + $0x38] sm:$0xff]
    %v789 = vsel %vm119, %v778, 0
    %v792 = vsel %vm119, %v779, 0
    %794 = vmatpush.msra.mxu0 0.0
    %795 = vmatpush.msra.mxu0 0.0
    %796 = vmatpush.msra.mxu0 0.0
    %797 = vmatpush.msra.mxu0 0.0
    %798 = vmatpush.msra.mxu0 0.0
    %799 = vmatpush.msra.mxu0 0.0
    %800 = vmatpush.msra.mxu0 0.0
    %801 = vmatpush.msra.mxu0 0.0
    %802 = vmatpush.msra.mxu0 0.0
    %803 = vmatpush.msra.mxu0 0.0
    %804 = vmatpush.msra.mxu0 0.0
    %805 = vmatpush.msra.mxu0 0.0
    %806 = vmatpush.msra.mxu0 %v786
    %807 = vmatpush.msra.mxu0 %v784
    %808 = vmatpush.msra.mxu0 %v782
    %809 = vmatpush.msra.mxu0 %v780
    %810 = vmatmul.f32.gmra.mxu0 %v789
    %v811 = vpop.f32.mrf.mxu0
    %v812 = vadd.f32 0.0, %v811
    %813 = vmatmul.f32.gmra.mxu0 %v792
    %v814 = vpop.f32.mrf.mxu0
    %v815 = vadd.f32 0.0, %v814
    %816 = vdwg.mxu0
    %817 = vmatpush.msra.mxu0 0.0
    %818 = vmatpush.msra.mxu0 0.0
    %819 = vmatpush.msra.mxu0 0.0
    %820 = vmatpush.msra.mxu0 0.0
    %821 = vmatpush.msra.mxu0 0.0
    %822 = vmatpush.msra.mxu0 0.0
    %823 = vmatpush.msra.mxu0 0.0
    %824 = vmatpush.msra.mxu0 0.0
    %825 = vmatpush.msra.mxu0 0.0
    %826 = vmatpush.msra.mxu0 0.0
    %827 = vmatpush.msra.mxu0 0.0
    %828 = vmatpush.msra.mxu0 0.0
    %829 = vmatpush.msra.mxu0 %v787
    %830 = vmatpush.msra.mxu0 %v785
    %831 = vmatpush.msra.mxu0 %v783
    %832 = vmatpush.msra.mxu0 %v781
    %833 = vmatmul.f32.gmra.mxu0 %v789
    %v834 = vpop.f32.mrf.mxu0
    %v835 = vadd.f32 0.0, %v834
    %836 = vmatmul.f32.gmra.mxu0 %v792
    %v837 = vpop.f32.mrf.mxu0
    %v838 = vadd.f32 0.0, %v837
    %839 = vdwg.mxu0
    %v840 = vxor.u32 %v812, 2147483648
    %v841 = vxor.u32 %v815, 2147483648
    %v842 = vmul.f32 %v840, 1.442695
    %v843 = vpow.pop %v842
    %v844 = vmul.f32 %v841, 1.442695
    %v845 = vpow.pop %v844
    %v846 = vadd.f32 %v843, 1.0
    %v847 = vadd.f32 %v845, 1.0
    %v848 = vrcp.pop %v846
    %v849 = vmul.f32 %v846, %v848
    %v850 = vsub.f32 1.0, %v849
    %v851 = vmul.f32 %v848, %v850
    %v852 = vadd.f32 %v848, %v851
    %vm853 = vweird.f32 %v846
    %vm854 = vweird.f32 %v848
    %vm855 = vmor %vm853, %vm854
    %v856 = vsel %vm855, %v848, %v852
    %v857 = vand.u32 2147483647, %v846
    %vm858 = vcmp.eq.f32.partialorder %v857, 8.507059e+37
    %v859 = vand.u32 %v846, 2147483648
    %v860 = vor.u32 1.1754944e-38, %v859
    %v861 = vsel %vm858, %v860, %v856
    %v862 = vmul.f32 1.0, %v861
    %v863 = vrcp.pop %v847
    %v864 = vmul.f32 %v847, %v863
    %v865 = vsub.f32 1.0, %v864
    %v866 = vmul.f32 %v863, %v865
    %v867 = vadd.f32 %v863, %v866
    %vm868 = vweird.f32 %v847
    %vm869 = vweird.f32 %v863
    %vm870 = vmor %vm868, %vm869
    %v871 = vsel %vm870, %v863, %v867
    %v872 = vand.u32 2147483647, %v847
    %vm873 = vcmp.eq.f32.partialorder %v872, 8.507059e+37
    %v874 = vand.u32 %v847, 2147483648
    %v875 = vor.u32 1.1754944e-38, %v874
    %v876 = vsel %vm873, %v875, %v871
    %v877 = vmul.f32 1.0, %v876
    %v878 = vmul.f32 %v812, %v862
    %v879 = vmul.f32 %v815, %v877
    %884 = vrot.lane.b32.xlu0 %v812, 32
    %v885 = vpop.permute.xlu0 %884
    %886 = vrot.lane.b32.xlu0 %v835, 32
    %v887 = vpop.permute.xlu0 %886
    %888 = vrot.lane.b32.xlu0 %v815, 32
    %v889 = vpop.permute.xlu0 %888
    %890 = vrot.lane.b32.xlu0 %v838, 32
    %v891 = vpop.permute.xlu0 %890
    %v892 = vsel %vm119, %v885, %v887
    %v893 = vsel %vm119, %v889, %v891
    %v896 = vmul.f32 %v878, %v892
    %v897 = vmul.f32 %v879, %v893
    %v898 = vld [vmem:[%s9] sm:$0xff]
    %v899 = vld [vmem:[%s9 + $0x8] sm:$0xff]
    %v900 = vld [vmem:[%s9 + $0x10] sm:$0xff]
    %v901 = vld [vmem:[%s9 + $0x18] sm:$0xff]
    %v902 = vld [vmem:[%s9 + $0x20] sm:$0xff]
    %v903 = vld [vmem:[%s9 + $0x28] sm:$0xff]
    %v904 = vld [vmem:[%s9 + $0x30] sm:$0xff]
    %v905 = vld [vmem:[%s9 + $0x38] sm:$0xff]
    %v906 = vld [vmem:[%s9 + $0x40] sm:$0xff]
    %v907 = vld [vmem:[%s9 + $0x48] sm:$0xff]
    %v908 = vld [vmem:[%s9 + $0x50] sm:$0xff]
    %v909 = vld [vmem:[%s9 + $0x58] sm:$0xff]
    %vm910 = vcmask 785408
    %v912 = vsel %vm910, %v896, 0
    %v915 = vsel %vm910, %v897, 0
    %917 = vmatpush.msra.mxu0 0.0
    %918 = vmatpush.msra.mxu0 0.0
    %919 = vmatpush.msra.mxu0 0.0
    %920 = vmatpush.msra.mxu0 0.0
    %921 = vmatpush.msra.mxu0 %v909
    %922 = vmatpush.msra.mxu0 %v908
    %923 = vmatpush.msra.mxu0 %v907
    %924 = vmatpush.msra.mxu0 %v906
    %925 = vmatpush.msra.mxu0 %v905
    %926 = vmatpush.msra.mxu0 %v904
    %927 = vmatpush.msra.mxu0 %v903
    %928 = vmatpush.msra.mxu0 %v902
    %929 = vmatpush.msra.mxu0 %v901
    %930 = vmatpush.msra.mxu0 %v900
    %931 = vmatpush.msra.mxu0 %v899
    %932 = vmatpush.msra.mxu0 %v898
    %933 = vmatmul.f32.gmra.mxu0 %v912
    %v934 = vpop.f32.mrf.mxu0
    %v935 = vadd.f32 0.0, %v934
    %936 = vmatmul.f32.gmra.mxu0 %v915
    %v937 = vpop.f32.mrf.mxu0
    %v938 = vadd.f32 0.0, %v937
    %939 = vdwg.mxu0
    %v940 = vadd.f32 %v738, %v935
    %v941 = vadd.f32 %v739, %v938
    %942 = vst.msk [vmem:[#allocation11] sm:$0xff] %vm119, %v940
    %943 = vst.msk [vmem:[#allocation11 + $0x8] sm:$0xff] %vm119, %v941
    // Predicated region
    $region62: #{tpu_custom_call.1} parent=1 // pred_check
      _
    $region63: #{tpu_custom_call.1} parent=1 // pred_check_branch
      %945 = sbr.rel (0) target = $region65
    $region64: #{tpu_custom_call.1} parent=1 // pred_region
      %947 = vsyncadd [#allocation4], 0
      %s948 = sshll.u32 [#allocation11], 4
      %s949 = int_to_ptr.vmem [resolvable:$true] %s948
      %s950 = sshll.u32 %s10, 4
      %s951 = int_to_ptr.hbm [resolvable:$true] %s950
      %956 = dma.vmem_to_hbm [thread:$0]  %s949, 256, %s951, [#allocation4], 128, 128, 8
    $region65: #{tpu_custom_call.1} parent=1 // pred_fallthru
      _
    // Predicated region
    $region66: #{tpu_custom_call.1} parent=1 // pred_check
      _
    $region67: #{tpu_custom_call.1} parent=1 // pred_check_branch
      %958 = sbr.rel (0) target = $region69
    $region68: #{tpu_custom_call.1} parent=1 // pred_region
      %960 = dma.done [#allocation4], 256
    $region69: #{tpu_custom_call.1} parent=1 // pred_fallthru
      _
    %961 = vsyncpa [#allocation3], 1
    %962 = vsyncpa [#allocation6], 1
    %963 = vsyncpa [#allocation9], 1
    %964 = vsyncpa [#allocation4], 1

</llo_original>
